<compile_context>
chip_gen: v7x
topology: tpu7x:2x2x1
jax: 0.10.0
libtpu: 0.0.40
codegen_flags: <defaults>
</compile_context>

<pallas_src>
import math
from functools import partial

import jax
import jax.numpy as jnp
from jax.experimental import pallas as pl
from jax.experimental.pallas import tpu as pltpu


def _copy_kernel(x_ref, o_ref):
    # Identity copy of the current tile; reshape == same bytes, new shape.
    o_ref[...] = x_ref[...]


def _resolve_shape(target_shape, total):
    """Mimic torch .view(): allow one -1 entry."""
    shape = list(target_shape)
    if -1 in shape:
        idx = shape.index(-1)
        known = 1
        for i, s in enumerate(shape):
            if i != idx:
                known *= s
        assert known > 0 and total % known == 0, \
            "view(): shape incompatible with input size"
        shape[idx] = total // known
    assert math.prod(shape) == total, "view(): shape incompatible with input size"
    return tuple(shape)


# Lane (last-dim) widths to try for the 2D slab, widest first: wide lane-dense
# tiles give the DMA engine long contiguous bursts and unmasked stores.
_LANE_CANDIDATES = (4096, 2048, 1024, 512, 256, 128)
# ~1 MiB per tile: with double-buffered in + out tiles that is ~4 MiB of VMEM,
# comfortably inside the scoped-VMEM defaults of v5e (16 MiB) / v6e / v7x.
_TILE_BYTES = 1 << 20


def _pick_slab(total, itemsize):
    """Choose (rows, cols, tile_rows) for a lane-dense 2D view of the data."""
    cols = None
    # Prefer a width whose row count is a multiple of 8 (full sublane tiles).
    for c in _LANE_CANDIDATES:
        if total % c == 0 and (total // c) % 8 == 0:
            cols = c
            break
    if cols is None:
        for c in _LANE_CANDIDATES:
            if total % c == 0:
                cols = c
                break
    if cols is None:
        return None  # not 128-divisible; caller falls back to metadata reshape
    rows = total // cols
    tile_rows = max(8, (_TILE_BYTES // (cols * itemsize)) // 8 * 8)
    tile_rows = min(rows, tile_rows)
    return rows, cols, tile_rows


@partial(jax.jit, static_argnums=1)
def pallas_reshape(x, target_shape):
    """Reshape `x` to `target_shape`; any data movement runs in a Pallas kernel."""
    total = x.size
    out_shape = _resolve_shape(target_shape, total)
    itemsize = jnp.dtype(x.dtype).itemsize

    slab = _pick_slab(total, itemsize)
    if slab is None or total < 8 * 128:
        # TODO(synk): odd/tiny sizes skip the kernel — a contiguous view is
        # metadata-only, and a (1, N) slab would force masked partial stores.
        return jnp.reshape(x, out_shape)

    rows, cols, tile_rows = slab
    flat = x.reshape(rows, cols)
    grid = (pl.cdiv(rows, tile_rows),)

    copied = pl.pallas_call(
        _copy_kernel,
        out_shape=jax.ShapeDtypeStruct((rows, cols), x.dtype),
        grid_spec=pltpu.PrefetchScalarGridSpec(
            num_scalar_prefetch=0,
            grid=grid,
            in_specs=[pl.BlockSpec((tile_rows, cols), lambda i: (i, 0))],
            out_specs=pl.BlockSpec((tile_rows, cols), lambda i: (i, 0)),
        ),
        input_output_aliases={0: 0},  # let XLA alias / elide the identity copy
        cost_estimate=pl.CostEstimate(
            flops=0,
            transcendentals=0,
            bytes_accessed=2 * total * itemsize,
        ),
        compiler_params=pltpu.CompilerParams(
            dimension_semantics=("parallel",),  # v7x: both TCs share the copy
        ),
    )(flat)

    return copied.reshape(out_shape)


if __name__ == "__main__":
    key = jax.random.PRNGKey(0)
    # NCHW input, e.g. the feature map a GAN generator/discriminator reshapes.
    x = jax.random.normal(key, (2, 4, 16, 16), dtype=jnp.float32)

    # Reshape((-1, 4 * 16 * 16)) — flatten channel+spatial dims per batch.
    target = (-1, 4 * 16 * 16)

    y = pallas_reshape(x, target)
    y = jax.block_until_ready(y)

    # Correctness check against plain JAX reshape (== torch .view ordering).
    ref = x.reshape(2, 4 * 16 * 16)
    assert y.shape == (2, 1024), y.shape
    assert y.dtype == x.dtype
    assert bool(jnp.all(y == ref)), "reshape mismatch"

    print("KERNEL_OK")
</pallas_src>

<mosaic_0001>
module attributes {stable_mosaic.version = 11 : i64} {
  func.func @_copy_kernel(%arg0: i32, %arg1: memref<8x256xf32, #tpu.memory_space<vmem>>, %arg2: memref<8x256xf32, #tpu.memory_space<vmem>>) attributes {dimension_semantics = [#tpu.dimension_semantics<parallel>], iteration_bounds = array<i64: 1>, scalar_prefetch = 0 : i64, scratch_operands = 0 : i64, tpu.core_type = #tpu.core_type<tc>, window_params = [{transform_indices = @transform_0, window_bounds = array<i64: 8, 256>}, {transform_indices = @transform_1, window_bounds = array<i64: 8, 256>}]} {
    %c0 = arith.constant 0 : index
    %c0_0 = arith.constant 0 : index
    %0 = vector.load %arg1[%c0, %c0_0] : memref<8x256xf32, #tpu.memory_space<vmem>>, vector<8x256xf32>
    %c0_1 = arith.constant 0 : index
    %c0_2 = arith.constant 0 : index
    %1 = vector.load %arg2[%c0_1, %c0_2] : memref<8x256xf32, #tpu.memory_space<vmem>>, vector<8x256xf32>
    tpu.vector_store %arg2[%c0_1, %c0_2], %0 {strides = array<i32>} : memref<8x256xf32, #tpu.memory_space<vmem>>, vector<8x256xf32>,
    return
  }
  func.func @transform_0(%arg0: i32) -> (i32, i32) {
    %c0_i32 = arith.constant 0 : i32
    %c0_i32_0 = arith.constant 0 : i32
    return %arg0, %c0_i32 : i32, i32
  }
  func.func @transform_1(%arg0: i32) -> (i32, i32) {
    %c0_i32 = arith.constant 0 : i32
    %c0_i32_0 = arith.constant 0 : i32
    return %arg0, %c0_i32 : i32, i32
  }
}

</mosaic_0001>

<llo_original>
// kernel: pallas_reshape.1
$region0: #{pallas_reshape.1}
  #allocation0 [shape = 'u32[]', space=smem, size = 0x4, offset = 0x4, fixed_abs, tag = 'smem constant byte address 0x4 - core index']
  #allocation1 [shape = 'u32[144,128]{1,0:T(1,128)}', space=vmem, size = 0x12000, scoped, tag = 'internal scratch']
  %s0 = inlined_call_operand.vmem [shape: f32[8,256], index: 0, kind: input, shape index: {}, may-alias: {0,1}]
  %s1 = inlined_call_operand.vmem [shape: f32[8,256], index: 1, kind: output, shape index: {}, may-alias: {0,1}]
  %s2 = sld [smem:[#allocation0]]
  $region14: #{pallas_reshape.1} parent=0
    _
  %s4 = ssub.s32 1, %s2
  %s5 = scalar_select 0, %s4, %s2
  // Predicated region
  $region2: #{pallas_reshape.1} parent=0 // pred_check
    _
  $region3: #{pallas_reshape.1} parent=0 // pred_check_branch
    %7 = sbr.rel (0) target = $region5
  $region4: #{pallas_reshape.1} parent=0 // pred_region
    _
  $region5: #{pallas_reshape.1} parent=0 // pred_fallthru
    _
  %v8 = vld [vmem:[%s0] sm:$0xff]
  %v9 = vld [vmem:[%s0 + $0x8] sm:$0xff]
  %10 = vst [vmem:[%s1] sm:$0xff] %v8
  %11 = vst [vmem:[%s1 + $0x8] sm:$0xff] %v9
  // Predicated region
  $region6: #{pallas_reshape.1} parent=0 // pred_check
    _
  $region7: #{pallas_reshape.1} parent=0 // pred_check_branch
    %13 = sbr.rel (0) target = $region9
  $region8: #{pallas_reshape.1} parent=0 // pred_region
    _
  $region9: #{pallas_reshape.1} parent=0 // pred_fallthru
    _
  // Predicated region
  $region10: #{pallas_reshape.1} parent=0 // pred_check
    _
  $region11: #{pallas_reshape.1} parent=0 // pred_check_branch
    %15 = sbr.rel (0) target = $region13
  $region12: #{pallas_reshape.1} parent=0 // pred_region
    _
  $region13: #{pallas_reshape.1} parent=0 // pred_fallthru
    _

</llo_original>
